<compile_context>
chip_gen: v5e
topology: v5e:2x2
jax: 0.10.0
libtpu: 0.0.40
codegen_flags: <defaults>
</compile_context>

<pallas_src>
import functools
import math

import jax
import jax.numpy as jnp
from jax.experimental import pallas as pl
from jax.experimental.pallas import tpu as pltpu


def _round_up(x: int, m: int) -> int:
    return (x + m - 1) // m * m


def _cdiv(a: int, b: int) -> int:
    return -(-a // b)


def _choose_row_tile(rows: int, tile_rows: int) -> int:
    """Spread rows evenly over the minimal number of <=tile_rows tiles."""
    tile_rows = max(8, _round_up(tile_rows, 8))
    n_tiles = _cdiv(rows, tile_rows)
    return _round_up(_cdiv(rows, n_tiles), 8)


def _largest_divisor_tile(total: int, want: int, step: int = 128) -> int:
    """Largest multiple of `step` that is <= want and divides `total` exactly."""
    want = min(_round_up(want, step), total)
    for cand in range(want, step - 1, -step):
        if total % cand == 0:
            return cand
    return total


def _tpu_vmem_and_cores():
    """(physical VMEM bytes per core, is_two_tensorcore_part). Robust to CPU."""
    kind = ""
    try:
        kind = jax.devices()[0].device_kind.lower()
    except Exception:
        pass
    two_tc = any(tag in kind for tag in ("v7", "7x", "v4", "v5p"))
    vmem = None
    try:
        vmem = int(pltpu.get_tpu_info().vmem_capacity_bytes)
    except Exception:
        vmem = None
    if vmem is None:
        vmem = 64 * 2**20 if ("v7" in kind or "7x" in kind) else 128 * 2**20
    return vmem, two_tc


def _ffn_kernel(x_ref, w1_ref, b1_ref, w2_ref, b2_ref, o_ref, acc_ref, *,
                approximate_gelu: bool):
    # x_ref : (TM, Ep)   w1_ref: (Ep, TH)  b1_ref: (1, TH)
    # w2_ref: (TH, Ep)   b2_ref: (1, Ep)   o_ref : (TM, Ep)
    # acc_ref: (TM, Ep) f32 accumulator, resident across the hidden-tile axis.
    j = pl.program_id(1)

    @pl.when(j == 0)
    def _():
        # Seed the accumulator with b2 so the epilogue is a pure cast.
        acc_ref[...] = jnp.broadcast_to(
            b2_ref[...].astype(jnp.float32), acc_ref.shape)

    # First matmul at operand dtype (bf16 -> full MXU rate), f32 accumulation.
    h = jnp.dot(x_ref[...], w1_ref[...], preferred_element_type=jnp.float32)
    h = h + b1_ref[...].astype(jnp.float32)

    if approximate_gelu:
        # tanh GELU: transcendental goes to the EUP slot (free under the MXU).
        c = math.sqrt(2.0 / math.pi)
        h = 0.5 * h * (1.0 + jnp.tanh(c * (h + 0.044715 * h * h * h)))
    else:
        # Exact erf GELU: matches torch.nn.GELU() default.
        h = 0.5 * h * (1.0 + jax.lax.erf(h * (1.0 / math.sqrt(2.0))))

    # Second matmul: accumulate partial products over hidden tiles in f32.
    acc_ref[...] += jnp.dot(h.astype(w2_ref.dtype), w2_ref[...],
                            preferred_element_type=jnp.float32)

    @pl.when(j == pl.num_programs(1) - 1)
    def _():
        o_ref[...] = acc_ref[...].astype(o_ref.dtype)


@functools.partial(
    jax.jit,
    static_argnames=("tile_rows", "tile_hidden", "approximate_gelu",
                     "resident_weights"))
def feed_forward_net(x, w1, b1, w2, b2, *, tile_rows=512, tile_hidden=2048,
                     approximate_gelu=False, resident_weights=None):
    """x: (..., E);  w1: (E, 4E) [in, out];  b1: (4E,);  w2: (4E, E);  b2: (E,).

    resident_weights: None = auto (resident when they fit VMEM), False = force
    hidden-axis streaming, True = prefer resident (falls back to streaming).
    """
    orig_shape = x.shape
    E = orig_shape[-1]
    H = w1.shape[1]
    rows = int(math.prod(orig_shape[:-1]))

    # --- hardware-aware budgets ------------------------------------------
    phys_vmem, two_tc = _tpu_vmem_and_cores()
    vmem_limit = min(int(phys_vmem * 0.85), 112 * 2**20)   # headroom for Mosaic
    usable = int(vmem_limit * 0.9)                          # headroom for misc

    # --- tile / padding bookkeeping --------------------------------------
    E_pad = _round_up(E, 128)                 # lane-dense minor dim
    H_pad = _round_up(H, 128)

    tm = _choose_row_tile(rows, tile_rows)
    # 2-TC parts shard the "parallel" row axis: make sure both cores get work.
    if two_tc and _cdiv(rows, tm) == 1 and rows >= 256:
        tm = _round_up(_cdiv(rows, 2), 8)

    x_it = x.dtype.itemsize
    w_it = w1.dtype.itemsize
    out_it = x.dtype.itemsize

    def vmem_usage(tm_, th_):
        buf = 2 * tm_ * E_pad * x_it               # x tile (double-buffered)
        buf += 2 * tm_ * E_pad * out_it            # out tile (double-buffered)
        buf += tm_ * E_pad * 4                     # f32 accumulator scratch
        buf += 2 * (E_pad * th_ + th_ * E_pad) * w_it  # W1/W2 slabs (x2 buffers)
        buf += 2 * (th_ + E_pad) * w_it            # b1 slab + b2
        return buf

    resident_fits = vmem_usage(tm, H_pad) <= usable
    if resident_weights is None:
        use_resident = resident_fits
    elif resident_weights:
        use_resident = resident_fits               # fall back if it can't fit
    else:
        use_resident = False

    if use_resident:
        th = H_pad                                  # weights DMA'd once / launch
    else:
        th = _largest_divisor_tile(H_pad, tile_hidden)
        while th > 128 and vmem_usage(tm, th) > usable:
            th = _largest_divisor_tile(H_pad, th // 2)
    # Last resort for very large E: shrink the row tile.
    while tm > 8 and vmem_usage(tm, th) > usable:
        tm = max(8, _round_up(tm // 2, 8))

    rows_pad = _round_up(rows, tm)
    grid = (rows_pad // tm, H_pad // th)

    # Zero padding is mathematically inert for this block:
    #  - padded x cols hit zero W1 rows; padded hidden cols are gelu(0+0)=0 and
    #    hit zero W2 rows; padded output cols come from zero W2 cols + zero b2;
    #    padded rows are sliced off at the end.
    x2d = x.reshape(rows, E)
    if rows_pad != rows or E_pad != E:
        x2d = jnp.pad(x2d, ((0, rows_pad - rows), (0, E_pad - E)))
    w1p = w1 if (E_pad == E and H_pad == H) else jnp.pad(
        w1, ((0, E_pad - E), (0, H_pad - H)))
    b1p = (b1 if H_pad == H else jnp.pad(b1, (0, H_pad - H))).reshape(1, H_pad)
    w2p = w2 if (E_pad == E and H_pad == H) else jnp.pad(
        w2, ((0, H_pad - H), (0, E_pad - E)))
    b2p = (b2 if E_pad == E else jnp.pad(b2, (0, E_pad - E))).reshape(1, E_pad)

    # --- advisory cost estimate -------------------------------------------
    weight_passes = 1 if grid[1] == 1 else grid[0]   # resident: fetched once
    gelu_flops = (0 if approximate_gelu else 30) * rows_pad * H_pad
    cost = pl.CostEstimate(
        flops=4 * rows_pad * E_pad * H_pad + gelu_flops,
        transcendentals=(rows_pad * H_pad if approximate_gelu else 0),
        bytes_accessed=(
            rows_pad * E_pad * (x_it + out_it)
            + weight_passes * (w1p.size + w2p.size) * w_it
            + weight_passes * (b1p.size + b2p.size) * w_it),
    )

    out2d = pl.pallas_call(
        functools.partial(_ffn_kernel, approximate_gelu=approximate_gelu),
        out_shape=jax.ShapeDtypeStruct((rows_pad, E_pad), x.dtype),
        grid_spec=pltpu.PrefetchScalarGridSpec(
            num_scalar_prefetch=0,
            grid=grid,
            in_specs=[
                pl.BlockSpec((tm, E_pad), lambda i, j: (i, 0)),   # x row tile
                pl.BlockSpec((E_pad, th), lambda i, j: (0, j)),   # W1 slab
                pl.BlockSpec((1, th),     lambda i, j: (0, j)),   # b1 slab
                pl.BlockSpec((th, E_pad), lambda i, j: (j, 0)),   # W2 slab
                pl.BlockSpec((1, E_pad),  lambda i, j: (0, 0)),   # b2
            ],
            out_specs=pl.BlockSpec((tm, E_pad), lambda i, j: (i, 0)),
            scratch_shapes=[pltpu.VMEM((tm, E_pad), jnp.float32)],
        ),
        compiler_params=pltpu.CompilerParams(
            dimension_semantics=("parallel", "arbitrary"),
            vmem_limit_bytes=vmem_limit,
        ),
        cost_estimate=cost,
    )(x2d, w1p, b1p, w2p, b2p)

    return out2d[:rows, :E].reshape(orig_shape)


def _reference(x, w1, b1, w2, b2, approximate=False):
    h = jnp.dot(x, w1) + b1
    if approximate:
        c = math.sqrt(2.0 / math.pi)
        h = 0.5 * h * (1.0 + jnp.tanh(c * (h + 0.044715 * h ** 3)))
    else:
        h = 0.5 * h * (1.0 + jax.lax.erf(h / jnp.sqrt(2.0)))
    return jnp.dot(h, w2) + b2


def _init_params(key, E, dtype=jnp.float32):
    # mimic nn.Linear's uniform(-1/sqrt(fan_in), 1/sqrt(fan_in)) init
    H = 4 * E
    kw1, kb1, kw2, kb2 = jax.random.split(key, 4)
    lim1 = 1.0 / math.sqrt(E)
    lim2 = 1.0 / math.sqrt(H)
    w1 = jax.random.uniform(kw1, (E, H), jnp.float32, -lim1, lim1).astype(dtype)
    b1 = jax.random.uniform(kb1, (H,), jnp.float32, -lim1, lim1).astype(dtype)
    w2 = jax.random.uniform(kw2, (H, E), jnp.float32, -lim2, lim2).astype(dtype)
    b2 = jax.random.uniform(kb2, (E,), jnp.float32, -lim2, lim2).astype(dtype)
    return w1, b1, w2, b2


if __name__ == "__main__":
    key = jax.random.PRNGKey(0)
    k1, k2, k3, k4 = jax.random.split(key, 4)

    # --- 1) toy GPT-2 config: embed_dim=32 -> hidden=128; batch=2, seq=8 ----
    B, S, E = 2, 8, 32
    x = jax.random.normal(k1, (B, S, E), dtype=jnp.float32)
    w1, b1, w2, b2 = _init_params(k2, E)
    out = jax.block_until_ready(feed_forward_net(x, w1, b1, w2, b2))
    ref = _reference(x, w1, b1, w2, b2)
    assert out.shape == (B, S, E)
    assert jnp.allclose(out, ref, atol=1e-5, rtol=1e-5), "toy f32 mismatch"

    # tanh-approx GELU path (EUP-routed transcendental)
    out_t = jax.block_until_ready(
        feed_forward_net(x, w1, b1, w2, b2, approximate_gelu=True))
    ref_t = _reference(x, w1, b1, w2, b2, approximate=True)
    assert jnp.allclose(out_t, ref_t, atol=1e-5, rtol=1e-5), "tanh gelu mismatch"

    # --- 2) larger f32 case, resident-weights fast path ----------------------
    B, S, E = 4, 128, 128
    x = jax.random.normal(k3, (B, S, E), dtype=jnp.float32)
    w1, b1, w2, b2 = _init_params(k4, E)
    out = jax.block_until_ready(feed_forward_net(x, w1, b1, w2, b2))
    ref = _reference(x, w1, b1, w2, b2)
    assert out.shape == (B, S, E)
    assert jnp.allclose(out, ref, atol=1e-3, rtol=1e-3), "resident f32 mismatch"

    # --- 3) streaming path: multiple row tiles x multiple hidden tiles ------
    out_s = jax.block_until_ready(
        feed_forward_net(x, w1, b1, w2, b2, tile_rows=256, tile_hidden=256,
                         resident_weights=False))
    assert jnp.allclose(out_s, ref, atol=1e-3, rtol=1e-3), "streaming mismatch"

    # --- 4) ragged shape (padding path exercised) ----------------------------
    Br, Sr, Er = 3, 5, 48
    xr = jax.random.normal(k1, (Br, Sr, Er), dtype=jnp.float32)
    w1r, b1r, w2r, b2r = _init_params(k2, Er)
    out_r = jax.block_until_ready(feed_forward_net(xr, w1r, b1r, w2r, b2r))
    ref_r = _reference(xr, w1r, b1r, w2r, b2r)
    assert out_r.shape == (Br, Sr, Er)
    assert jnp.allclose(out_r, ref_r, atol=1e-4, rtol=1e-4), "ragged mismatch"

    # --- 5) bf16 smoke test (full-rate MXU operands, f32 accumulation) ------
    out_bf16 = jax.block_until_ready(
        feed_forward_net(x.astype(jnp.bfloat16),
                         w1.astype(jnp.bfloat16), b1.astype(jnp.bfloat16),
                         w2.astype(jnp.bfloat16), b2.astype(jnp.bfloat16)))
    assert out_bf16.shape == (B, S, E)
    assert bool(jnp.all(jnp.isfinite(out_bf16.astype(jnp.float32))))

    # TODO(synk): config.dropout is never applied in the torch forward(), so it
    # is intentionally not implemented here.
    print("KERNEL_OK")
</pallas_src>

<mosaic_0001>
module attributes {stable_mosaic.version = 11 : i64} {
  func.func @_ffn_kernel(%arg0: i32, %arg1: i32, %arg2: memref<16x128xf32, #tpu.memory_space<vmem>>, %arg3: memref<128x128xf32, #tpu.memory_space<vmem>>, %arg4: memref<1x128xf32, #tpu.memory_space<vmem>>, %arg5: memref<128x128xf32, #tpu.memory_space<vmem>>, %arg6: memref<1x128xf32, #tpu.memory_space<vmem>>, %arg7: memref<16x128xf32, #tpu.memory_space<vmem>>, %arg8: memref<16x128xf32, #tpu.memory_space<vmem>>) attributes {dimension_semantics = [#tpu.dimension_semantics<parallel>, #tpu.dimension_semantics<arbitrary>], iteration_bounds = array<i64: 1, 1>, scalar_prefetch = 0 : i64, scratch_operands = 1 : i64, tpu.core_type = #tpu.core_type<tc>, window_params = [{transform_indices = @transform_0, window_bounds = array<i64: 16, 128>}, {transform_indices = @transform_1, window_bounds = array<i64: 128, 128>}, {transform_indices = @transform_2, window_bounds = array<i64: 1, 128>}, {transform_indices = @transform_3, window_bounds = array<i64: 128, 128>}, {pipeline_mode = #tpu.pipeline_mode<synchronous>, transform_indices = @transform_4, window_bounds = array<i64: 1, 128>}, {transform_indices = @transform_5, window_bounds = array<i64: 16, 128>}]} {
    %c0_i32 = arith.constant 0 : i32
    %0 = arith.cmpi eq, %arg1, %c0_i32 : i32
    %1 = arith.extui %0 : i1 to i32
    %c0_i32_0 = arith.constant 0 : i32
    %2 = arith.cmpi ne, %1, %c0_i32_0 : i32
    scf.if %2 {
      %c0_18 = arith.constant 0 : index
      %c0_19 = arith.constant 0 : index
      %25 = vector.load %arg6[%c0_18, %c0_19] : memref<1x128xf32, #tpu.memory_space<vmem>>, vector<1x128xf32>
      %26 = vector.shape_cast %25 : vector<1x128xf32> to vector<1x128xf32>
      %27 = vector.broadcast %26 : vector<1x128xf32> to vector<16x128xf32>
      %c0_20 = arith.constant 0 : index
      %c0_21 = arith.constant 0 : index
      %28 = vector.load %arg8[%c0_20, %c0_21] : memref<16x128xf32, #tpu.memory_space<vmem>>, vector<16x128xf32>
      tpu.vector_store %arg8[%c0_20, %c0_21], %27 {strides = array<i32>} : memref<16x128xf32, #tpu.memory_space<vmem>>, vector<16x128xf32>,
    } else {
    }
    %c0 = arith.constant 0 : index
    %c0_1 = arith.constant 0 : index
    %3 = vector.load %arg2[%c0, %c0_1] : memref<16x128xf32, #tpu.memory_space<vmem>>, vector<16x128xf32>
    %c0_2 = arith.constant 0 : index
    %c0_3 = arith.constant 0 : index
    %4 = vector.load %arg3[%c0_2, %c0_3] : memref<128x128xf32, #tpu.memory_space<vmem>>, vector<128x128xf32>
    %cst = arith.constant dense<0.000000e+00> : vector<16x128xf32>
    %5 = tpu.matmul %3, %4, %cst {dimension_numbers = #tpu.dot_dimension_numbers<[1], [0], [0], [1], [0, 0, 1, 1], [], []>} : vector<16x128xf32>, vector<128x128xf32>, vector<16x128xf32> -> vector<16x128xf32>
    %c0_4 = arith.constant 0 : index
    %c0_5 = arith.constant 0 : index
    %6 = vector.load %arg4[%c0_4, %c0_5] : memref<1x128xf32, #tpu.memory_space<vmem>>, vector<1x128xf32>
    %7 = vector.broadcast %6 : vector<1x128xf32> to vector<16x128xf32>
    %8 = arith.addf %5, %7 : vector<16x128xf32>
    %cst_6 = arith.constant 5.000000e-01 : f32
    %9 = vector.broadcast %cst_6 : f32 to vector<16x128xf32>
    %10 = arith.mulf %9, %8 : vector<16x128xf32>
    %cst_7 = arith.constant 0.707106769 : f32
    %11 = vector.broadcast %cst_7 : f32 to vector<16x128xf32>
    %12 = arith.mulf %8, %11 : vector<16x128xf32>
    %13 = math.erf %12 : vector<16x128xf32>
    %cst_8 = arith.constant 1.000000e+00 : f32
    %14 = vector.broadcast %cst_8 : f32 to vector<16x128xf32>
    %15 = arith.addf %14, %13 : vector<16x128xf32>
    %16 = arith.mulf %10, %15 : vector<16x128xf32>
    %c0_9 = arith.constant 0 : index
    %c0_10 = arith.constant 0 : index
    %17 = vector.load %arg8[%c0_9, %c0_10] : memref<16x128xf32, #tpu.memory_space<vmem>>, vector<16x128xf32>
    %c0_11 = arith.constant 0 : index
    %c0_12 = arith.constant 0 : index
    %18 = vector.load %arg5[%c0_11, %c0_12] : memref<128x128xf32, #tpu.memory_space<vmem>>, vector<128x128xf32>
    %cst_13 = arith.constant dense<0.000000e+00> : vector<16x128xf32>
    %19 = tpu.matmul %16, %18, %cst_13 {dimension_numbers = #tpu.dot_dimension_numbers<[1], [0], [0], [1], [0, 0, 1, 1], [], []>} : vector<16x128xf32>, vector<128x128xf32>, vector<16x128xf32> -> vector<16x128xf32>
    %20 = arith.addf %17, %19 : vector<16x128xf32>
    %c0_14 = arith.constant 0 : index
    %c0_15 = arith.constant 0 : index
    %21 = vector.load %arg8[%c0_14, %c0_15] : memref<16x128xf32, #tpu.memory_space<vmem>>, vector<16x128xf32>
    tpu.vector_store %arg8[%c0_14, %c0_15], %20 {strides = array<i32>} : memref<16x128xf32, #tpu.memory_space<vmem>>, vector<16x128xf32>,
    %c0_i32_16 = arith.constant 0 : i32
    %22 = arith.cmpi eq, %arg1, %c0_i32_16 : i32
    %23 = arith.extui %22 : i1 to i32
    %c0_i32_17 = arith.constant 0 : i32
    %24 = arith.cmpi ne, %23, %c0_i32_17 : i32
    scf.if %24 {
      %c0_18 = arith.constant 0 : index
      %c0_19 = arith.constant 0 : index
      %25 = vector.load %arg8[%c0_18, %c0_19] : memref<16x128xf32, #tpu.memory_space<vmem>>, vector<16x128xf32>
      %c0_20 = arith.constant 0 : index
      %c0_21 = arith.constant 0 : index
      %26 = vector.load %arg7[%c0_20, %c0_21] : memref<16x128xf32, #tpu.memory_space<vmem>>, vector<16x128xf32>
      tpu.vector_store %arg7[%c0_20, %c0_21], %25 {strides = array<i32>} : memref<16x128xf32, #tpu.memory_space<vmem>>, vector<16x128xf32>,
    } else {
    }
    return
  }
  func.func @transform_0(%arg0: i32, %arg1: i32) -> (i32, i32) {
    %c0_i32 = arith.constant 0 : i32
    %c0_i32_0 = arith.constant 0 : i32
    return %arg0, %c0_i32 : i32, i32
  }
  func.func @transform_1(%arg0: i32, %arg1: i32) -> (i32, i32) {
    %c0_i32 = arith.constant 0 : i32
    %c0_i32_0 = arith.constant 0 : i32
    return %c0_i32, %arg1 : i32, i32
  }
  func.func @transform_2(%arg0: i32, %arg1: i32) -> (i32, i32) {
    %c0_i32 = arith.constant 0 : i32
    %c0_i32_0 = arith.constant 0 : i32
    return %c0_i32, %arg1 : i32, i32
  }
  func.func @transform_3(%arg0: i32, %arg1: i32) -> (i32, i32) {
    %c0_i32 = arith.constant 0 : i32
    %c0_i32_0 = arith.constant 0 : i32
    return %arg1, %c0_i32 : i32, i32
  }
  func.func @transform_4(%arg0: i32, %arg1: i32) -> (i32, i32) {
    %c0_i32 = arith.constant 0 : i32
    %c0_i32_0 = arith.constant 0 : i32
    %c0_i32_1 = arith.constant 0 : i32
    return %c0_i32, %c0_i32_0 : i32, i32
  }
  func.func @transform_5(%arg0: i32, %arg1: i32) -> (i32, i32) {
    %c0_i32 = arith.constant 0 : i32
    %c0_i32_0 = arith.constant 0 : i32
    return %arg0, %c0_i32 : i32, i32
  }
}

</mosaic_0001>

<llo_original>
// kernel: feed_forward_net.1
$region0: #{feed_forward_net.1}
  #allocation0 [shape = 'u32[]', space=smem, size = 0x4, offset = 0x4, fixed_abs, tag = 'smem constant byte address 0x4 - core index']
  #allocation1 [shape = 'u32[72,128]{1,0:T(1,128)}', space=vmem, size = 0x9000, scoped, tag = 'internal scratch']
  #allocation2 [shape = 'f32[16,128]{1,0:T(8,128)}', space=vmem, size = 0x2000, scoped, tag = 'scratch operand']
  %s0 = inlined_call_operand.vmem [shape: f32[16,128], index: 0, kind: input, shape index: {}]
  %s1 = inlined_call_operand.vmem [shape: f32[128,128], index: 1, kind: input, shape index: {}]
  %s2 = inlined_call_operand.vmem [shape: f32[1,128], index: 2, kind: input, shape index: {}]
  %s3 = inlined_call_operand.vmem [shape: f32[128,128], index: 3, kind: input, shape index: {}]
  %s4 = inlined_call_operand.vmem [shape: f32[1,128], index: 4, kind: input, shape index: {}]
  %s5 = inlined_call_operand.vmem [shape: f32[16,128], index: 5, kind: output, shape index: {}]
  %s6 = sld [smem:[#allocation0]]
  $region38: #{feed_forward_net.1} parent=0
    _
  %s8 = ssub.s32 1, %s6
  %s9 = scalar_select 0, %s8, %s6
  // Predicated region
  $region2: #{feed_forward_net.1} parent=0 // pred_check
    _
  $region3: #{feed_forward_net.1} parent=0 // pred_check_branch
    %11 = sbr.rel (0) target = $region5
  $region4: #{feed_forward_net.1} parent=0 // pred_region
    _
  $region5: #{feed_forward_net.1} parent=0 // pred_fallthru
    _
  // Predicated region
  $region6: #{feed_forward_net.1} parent=0 // pred_check
    _
  $region7: #{feed_forward_net.1} parent=0 // pred_check_branch
    %13 = sbr.rel (0) target = $region9
  $region8: #{feed_forward_net.1} parent=0 // pred_region
    _
  $region9: #{feed_forward_net.1} parent=0 // pred_fallthru
    _
  // Predicated region
  $region10: #{feed_forward_net.1} parent=0 // pred_check
    _
  $region11: #{feed_forward_net.1} parent=0 // pred_check_branch
    %15 = sbr.rel (0) target = $region13
  $region12: #{feed_forward_net.1} parent=0 // pred_region
    _
  $region13: #{feed_forward_net.1} parent=0 // pred_fallthru
    _
  // Predicated region
  $region14: #{feed_forward_net.1} parent=0 // pred_check
    _
  $region15: #{feed_forward_net.1} parent=0 // pred_check_branch
    %17 = sbr.rel (0) target = $region17
  $region16: #{feed_forward_net.1} parent=0 // pred_region
    _
  $region17: #{feed_forward_net.1} parent=0 // pred_fallthru
    _
  // Predicated region
  $region18: #{feed_forward_net.1} parent=0 // pred_check
    _
  $region19: #{feed_forward_net.1} parent=0 // pred_check_branch
    %19 = sbr.rel (0) target = $region21
  $region20: #{feed_forward_net.1} parent=0 // pred_region
    _
  $region21: #{feed_forward_net.1} parent=0 // pred_fallthru
    _
  %p20 = scmp.eq.s32.totalorder 0, 0
  // Predicated region
  $region22: #{feed_forward_net.1} parent=0 // pred_check
    %p21 = pneg %p20
  $region23: #{feed_forward_net.1} parent=0 // pred_check_branch
    %23 = sbr.rel (%p21) target = $region25
  $region24: #{feed_forward_net.1} parent=0 // pred_region
    %v24 = vld [vmem:[%s4] sm:$0x1]
    %v26 = vperm.slane %v24, 0
    %28 = vst [vmem:[#allocation2] sm:$0xff] %v26
    %29 = vst [vmem:[#allocation2 + $0x8] sm:$0xff] %v26
  $region25: #{feed_forward_net.1} parent=0 // pred_fallthru
    _
  %v30 = vld [vmem:[%s0] sm:$0xff]
  %v31 = vld [vmem:[%s0 + $0x8] sm:$0xff]
  %v32 = vld [vmem:[%s1] sm:$0xff]
  %v33 = vld [vmem:[%s1 + $0x8] sm:$0xff]
  %v34 = vld [vmem:[%s1 + $0x10] sm:$0xff]
  %v35 = vld [vmem:[%s1 + $0x18] sm:$0xff]
  %v36 = vld [vmem:[%s1 + $0x20] sm:$0xff]
  %v37 = vld [vmem:[%s1 + $0x28] sm:$0xff]
  %v38 = vld [vmem:[%s1 + $0x30] sm:$0xff]
  %v39 = vld [vmem:[%s1 + $0x38] sm:$0xff]
  %v40 = vld [vmem:[%s1 + $0x40] sm:$0xff]
  %v41 = vld [vmem:[%s1 + $0x48] sm:$0xff]
  %v42 = vld [vmem:[%s1 + $0x50] sm:$0xff]
  %v43 = vld [vmem:[%s1 + $0x58] sm:$0xff]
  %v44 = vld [vmem:[%s1 + $0x60] sm:$0xff]
  %v45 = vld [vmem:[%s1 + $0x68] sm:$0xff]
  %v46 = vld [vmem:[%s1 + $0x70] sm:$0xff]
  %v47 = vld [vmem:[%s1 + $0x78] sm:$0xff]
  %v48 = vld [vmem:[%s2] sm:$0x1]
  %v50 = vperm.slane %v48, 0
  %52 = vmatpush.msra.mxu0 %v47
  %53 = vmatpush.msra.mxu0 %v46
  %54 = vmatpush.msra.mxu0 %v45
  %55 = vmatpush.msra.mxu0 %v44
  %56 = vmatpush.msra.mxu0 %v43
  %57 = vmatpush.msra.mxu0 %v42
  %58 = vmatpush.msra.mxu0 %v41
  %59 = vmatpush.msra.mxu0 %v40
  %60 = vmatpush.msra.mxu0 %v39
  %61 = vmatpush.msra.mxu0 %v38
  %62 = vmatpush.msra.mxu0 %v37
  %63 = vmatpush.msra.mxu0 %v36
  %64 = vmatpush.msra.mxu0 %v35
  %65 = vmatpush.msra.mxu0 %v34
  %66 = vmatpush.msra.mxu0 %v33
  %67 = vmatpush.msra.mxu0 %v32
  %68 = vmatmul.f32.gmra.mxu0 %v30
  %v69 = vpop.f32.mrf.mxu0
  %v70 = vadd.f32 %v50, %v69
  %71 = vmatmul.f32.gmra.mxu0 %v31
  %v72 = vpop.f32.mrf.mxu0
  %v73 = vadd.f32 %v50, %v72
  %74 = vdwg.mxu0
  %v75 = vmul.f32 %v70, 0.5
  %v76 = vmul.f32 %v73, 0.5
  %v77 = vmul.f32 %v70, 0.70710677
  %v78 = vmul.f32 %v73, 0.70710677
  %v79 = vmul.f32 %v77, %v77
  %v80 = vmin.f32 16.0, %v79
  %v81 = vmul.f32 %v80, 2.1237322e-06
  %v82 = vadd.f32 %v81, 0.00028619796
  %v83 = vmul.f32 %v80, %v82
  %v84 = vadd.f32 %v83, 0.0036580483
  %v85 = vmul.f32 %v80, %v84
  %v86 = vadd.f32 %v85, 0.05243302
  %v87 = vmul.f32 %v80, %v86
  %v88 = vadd.f32 %v87, 0.18741608
  %v89 = vmul.f32 %v80, %v88
  %v90 = vadd.f32 %v89, 1.1283791
  %v91 = vmul.f32 %v77, %v90
  %v92 = vmul.f32 %v80, 3.8918573e-05
  %v93 = vadd.f32 %v92, 0.001143296
  %v94 = vmul.f32 %v80, %v93
  %v95 = vadd.f32 %v94, 0.014752088
  %v96 = vmul.f32 %v80, %v95
  %v97 = vadd.f32 %v96, 0.112945676
  %v98 = vmul.f32 %v80, %v97
  %v99 = vadd.f32 %v98, 0.4994258
  %v100 = vmul.f32 %v80, %v99
  %v101 = vadd.f32 %v100, 1.0
  %v102 = vrcp.pop %v101
  %v103 = vmul.f32 %v101, %v102
  %v104 = vsub.f32 1.0, %v103
  %v105 = vmul.f32 %v102, %v104
  %v106 = vadd.f32 %v102, %v105
  %vm107 = vweird.f32 %v101
  %vm108 = vweird.f32 %v102
  %vm109 = vmor %vm107, %vm108
  %v110 = vsel %vm109, %v102, %v106
  %v111 = vand.u32 2147483647, %v101
  %vm112 = vcmp.eq.f32.partialorder %v111, 8.507059e+37
  %v113 = vand.u32 %v101, 2147483648
  %v114 = vor.u32 1.1754944e-38, %v113
  %v115 = vsel %vm112, %v114, %v110
  %v116 = vmul.f32 %v91, %v115
  %v117 = vmin.f32 %v116, 1.0
  %v118 = vmax.f32 %v117, -1.0
  %v119 = vmul.f32 %v78, %v78
  %v120 = vmin.f32 16.0, %v119
  %v121 = vmul.f32 %v120, 2.1237322e-06
  %v122 = vadd.f32 %v121, 0.00028619796
  %v123 = vmul.f32 %v120, %v122
  %v124 = vadd.f32 %v123, 0.0036580483
  %v125 = vmul.f32 %v120, %v124
  %v126 = vadd.f32 %v125, 0.05243302
  %v127 = vmul.f32 %v120, %v126
  %v128 = vadd.f32 %v127, 0.18741608
  %v129 = vmul.f32 %v120, %v128
  %v130 = vadd.f32 %v129, 1.1283791
  %v131 = vmul.f32 %v78, %v130
  %v132 = vmul.f32 %v120, 3.8918573e-05
  %v133 = vadd.f32 %v132, 0.001143296
  %v134 = vmul.f32 %v120, %v133
  %v135 = vadd.f32 %v134, 0.014752088
  %v136 = vmul.f32 %v120, %v135
  %v137 = vadd.f32 %v136, 0.112945676
  %v138 = vmul.f32 %v120, %v137
  %v139 = vadd.f32 %v138, 0.4994258
  %v140 = vmul.f32 %v120, %v139
  %v141 = vadd.f32 %v140, 1.0
  %v142 = vrcp.pop %v141
  %v143 = vmul.f32 %v141, %v142
  %v144 = vsub.f32 1.0, %v143
  %v145 = vmul.f32 %v142, %v144
  %v146 = vadd.f32 %v142, %v145
  %vm147 = vweird.f32 %v141
  %vm148 = vweird.f32 %v142
  %vm149 = vmor %vm147, %vm148
  %v150 = vsel %vm149, %v142, %v146
  %v151 = vand.u32 2147483647, %v141
  %vm152 = vcmp.eq.f32.partialorder %v151, 8.507059e+37
  %v153 = vand.u32 %v141, 2147483648
  %v154 = vor.u32 1.1754944e-38, %v153
  %v155 = vsel %vm152, %v154, %v150
  %v156 = vmul.f32 %v131, %v155
  %v157 = vmin.f32 %v156, 1.0
  %v158 = vmax.f32 %v157, -1.0
  %v159 = vadd.f32 %v118, 1.0
  %v160 = vadd.f32 %v158, 1.0
  %v161 = vmul.f32 %v75, %v159
  %v162 = vmul.f32 %v76, %v160
  %v163 = vld [vmem:[#allocation2] sm:$0xff]
  %v164 = vld [vmem:[#allocation2 + $0x8] sm:$0xff]
  %v165 = vld [vmem:[%s3] sm:$0xff]
  %v166 = vld [vmem:[%s3 + $0x8] sm:$0xff]
  %v167 = vld [vmem:[%s3 + $0x10] sm:$0xff]
  %v168 = vld [vmem:[%s3 + $0x18] sm:$0xff]
  %v169 = vld [vmem:[%s3 + $0x20] sm:$0xff]
  %v170 = vld [vmem:[%s3 + $0x28] sm:$0xff]
  %v171 = vld [vmem:[%s3 + $0x30] sm:$0xff]
  %v172 = vld [vmem:[%s3 + $0x38] sm:$0xff]
  %v173 = vld [vmem:[%s3 + $0x40] sm:$0xff]
  %v174 = vld [vmem:[%s3 + $0x48] sm:$0xff]
  %v175 = vld [vmem:[%s3 + $0x50] sm:$0xff]
  %v176 = vld [vmem:[%s3 + $0x58] sm:$0xff]
  %v177 = vld [vmem:[%s3 + $0x60] sm:$0xff]
  %v178 = vld [vmem:[%s3 + $0x68] sm:$0xff]
  %v179 = vld [vmem:[%s3 + $0x70] sm:$0xff]
  %v180 = vld [vmem:[%s3 + $0x78] sm:$0xff]
  %181 = vmatpush.msra.mxu0 %v180
  %182 = vmatpush.msra.mxu0 %v179
  %183 = vmatpush.msra.mxu0 %v178
  %184 = vmatpush.msra.mxu0 %v177
  %185 = vmatpush.msra.mxu0 %v176
  %186 = vmatpush.msra.mxu0 %v175
  %187 = vmatpush.msra.mxu0 %v174
  %188 = vmatpush.msra.mxu0 %v173
  %189 = vmatpush.msra.mxu0 %v172
  %190 = vmatpush.msra.mxu0 %v171
  %191 = vmatpush.msra.mxu0 %v170
  %192 = vmatpush.msra.mxu0 %v169
  %193 = vmatpush.msra.mxu0 %v168
  %194 = vmatpush.msra.mxu0 %v167
  %195 = vmatpush.msra.mxu0 %v166
  %196 = vmatpush.msra.mxu0 %v165
  %197 = vmatmul.f32.gmra.mxu0 %v161
  %v198 = vpop.f32.mrf.mxu0
  %v199 = vadd.f32 0.0, %v198
  %200 = vmatmul.f32.gmra.mxu0 %v162
  %v201 = vpop.f32.mrf.mxu0
  %v202 = vadd.f32 0.0, %v201
  %203 = vdwg.mxu0
  %v204 = vadd.f32 %v163, %v199
  %v205 = vadd.f32 %v164, %v202
  %206 = vst [vmem:[#allocation2] sm:$0xff] %v204
  %207 = vst [vmem:[#allocation2 + $0x8] sm:$0xff] %v205
  // Predicated region
  $region26: #{feed_forward_net.1} parent=0 // pred_check
    %p208 = pneg %p20
  $region27: #{feed_forward_net.1} parent=0 // pred_check_branch
    %210 = sbr.rel (%p208) target = $region29
  $region28: #{feed_forward_net.1} parent=0 // pred_region
    %v211 = vld [vmem:[#allocation2] sm:$0xff]
    %v212 = vld [vmem:[#allocation2 + $0x8] sm:$0xff]
    %213 = vst [vmem:[%s5] sm:$0xff] %v211
    %214 = vst [vmem:[%s5 + $0x8] sm:$0xff] %v212
  $region29: #{feed_forward_net.1} parent=0 // pred_fallthru
    _
  // Predicated region
  $region30: #{feed_forward_net.1} parent=0 // pred_check
    _
  $region31: #{feed_forward_net.1} parent=0 // pred_check_branch
    %216 = sbr.rel (0) target = $region33
  $region32: #{feed_forward_net.1} parent=0 // pred_region
    _
  $region33: #{feed_forward_net.1} parent=0 // pred_fallthru
    _
  // Predicated region
  $region34: #{feed_forward_net.1} parent=0 // pred_check
    _
  $region35: #{feed_forward_net.1} parent=0 // pred_check_branch
    %218 = sbr.rel (0) target = $region37
  $region36: #{feed_forward_net.1} parent=0 // pred_region
    _
  $region37: #{feed_forward_net.1} parent=0 // pred_fallthru
    _

</llo_original>
